<compile_context>
chip_gen: v6e
topology: v6e:2x2x1
jax: 0.10.0
libtpu: 0.0.40
codegen_flags: <defaults>
</compile_context>

<pallas_src>
import functools

import jax
import jax.numpy as jnp
from jax import lax
from jax.experimental import pallas as pl
from jax.experimental.pallas import tpu as pltpu

N_VOCAB = 26
EXTRA = 1
INPUT_DIM = N_VOCAB + EXTRA          # 27
HIDDEN = 512
NUM_LAYERS = 2
MID = 256
IN_FEAT = MID + HIDDEN * 2           # 1280
HEAD_PAD = 128                       # lane-dense padded head output width


# ----------------------------------------------------------------------------
# Kernel 1: batched input projection  gates_x[d] = x @ W_ih[d] + b[d]
# Grid = (2,) over directions ("parallel"); M = T*B for full MXU occupancy.
# ----------------------------------------------------------------------------
def input_proj_kernel(x_ref, wih_ref, b_ref, gx_ref):
    gx_ref[...] = (
        jnp.dot(x_ref[...], wih_ref[...], preferred_element_type=jnp.float32)
        + b_ref[...])


def run_input_proj(x2d_bf16, wih, b):
    # x2d_bf16: (T*B, D) bf16 ; wih: (2, D, 4H) bf16 ; b: (2, 1, 4H) f32
    TB, D = x2d_bf16.shape
    H4 = wih.shape[-1]
    # TODO(synk): tile the M (=T*B) dimension if T*B grows beyond a few K rows.
    return pl.pallas_call(
        input_proj_kernel,
        grid=(2,),
        in_specs=[
            pl.BlockSpec((TB, D), lambda d: (0, 0)),
            pl.BlockSpec((None, D, H4), lambda d: (d, 0, 0)),
            pl.BlockSpec((None, 1, H4), lambda d: (d, 0, 0)),
        ],
        out_specs=pl.BlockSpec((None, TB, H4), lambda d: (d, 0, 0)),
        out_shape=jax.ShapeDtypeStruct((2, TB, H4), jnp.float32),
        compiler_params=pltpu.CompilerParams(
            dimension_semantics=("parallel",)),
    )(x2d_bf16, wih, b)


# ----------------------------------------------------------------------------
# Kernel 2: fused bidirectional recurrence.
# Grid = (2 directions ["parallel"], T chunks ["arbitrary"]).  h/c live in VMEM
# scratch across chunks; backward direction walks chunks (and steps inside a
# chunk) in descending time order via the index_map / local index formula.
# ----------------------------------------------------------------------------
def lstm_recurrent_kernel(gx_ref, mask_ref, whh_ref, *rest,
                          t_chunk, emit_hseq):
    if emit_hseq:
        hseq_ref, hfin_ref, h_sc, c_sc = rest
    else:
        hfin_ref, h_sc, c_sc = rest

    d = pl.program_id(0)                 # 0 = forward, 1 = backward

    @pl.when(pl.program_id(1) == 0)
    def _():
        h_sc[...] = jnp.zeros_like(h_sc)
        c_sc[...] = jnp.zeros_like(c_sc)

    H = h_sc.shape[-1]

    def step(i, carry):
        # local time index inside the chunk: ascending (fwd) / descending (bwd)
        lt = d * (t_chunk - 1) + (1 - 2 * d) * i
        gx = gx_ref[lt]                          # (B, 4H) f32: x@Wih + b
        keep = mask_ref[lt] > 0.0                # (B, 1) bool: t < len[b]
        h = h_sc[...]
        c = c_sc[...]
        gates = gx + jnp.dot(h.astype(jnp.bfloat16), whh_ref[...],
                             preferred_element_type=jnp.float32)
        # PyTorch gate ordering: i, f, g, o
        i_g = jax.nn.sigmoid(gates[:, 0 * H:1 * H])
        f_g = jax.nn.sigmoid(gates[:, 1 * H:2 * H])
        g_g = jnp.tanh(gates[:, 2 * H:3 * H])
        o_g = jax.nn.sigmoid(gates[:, 3 * H:4 * H])
        c_new = f_g * c + i_g * g_g
        h_new = o_g * jnp.tanh(c_new)
        h_sc[...] = jnp.where(keep, h_new, h)
        c_sc[...] = jnp.where(keep, c_new, c)
        if emit_hseq:
            # zeros at padded positions (pad_packed_sequence semantics)
            hseq_ref[lt] = jnp.where(keep, h_new, 0.0).astype(hseq_ref.dtype)
        return carry

    lax.fori_loop(0, t_chunk, step, 0,
                  unroll=t_chunk if t_chunk <= 8 else 4)
    hfin_ref[...] = h_sc[...]


def run_lstm_recurrent(gx, mask, whh, *, emit_hseq):
    # gx: (2, T, B, 4H) f32 ; mask: (T, B, 1) f32 ; whh: (2, H, 4H) bf16
    _, T, B, H4 = gx.shape
    H = H4 // 4
    Tc = T if T <= 32 else 32
    assert T % Tc == 0, "pad T to a multiple of the time chunk"
    nT = T // Tc

    def t_blk(d, t):
        # forward walks chunks 0..nT-1, backward walks nT-1..0
        return d * (nT - 1) + (1 - 2 * d) * t

    in_specs = [
        pl.BlockSpec((None, Tc, B, H4), lambda d, t: (d, t_blk(d, t), 0, 0)),
        pl.BlockSpec((Tc, B, 1), lambda d, t: (t_blk(d, t), 0, 0)),
        pl.BlockSpec((None, H, H4), lambda d, t: (d, 0, 0)),
    ]
    hfin_spec = pl.BlockSpec((B, H), lambda d, t: (0, d))       # (B, 2H) halves
    hfin_shape = jax.ShapeDtypeStruct((B, 2 * H), jnp.float32)
    if emit_hseq:
        out_specs = (
            pl.BlockSpec((Tc, B, H), lambda d, t: (t_blk(d, t), 0, d)),
            hfin_spec)
        out_shape = (jax.ShapeDtypeStruct((T, B, 2 * H), jnp.bfloat16),
                     hfin_shape)
    else:
        out_specs = hfin_spec
        out_shape = hfin_shape

    kernel = functools.partial(lstm_recurrent_kernel,
                               t_chunk=Tc, emit_hseq=emit_hseq)
    return pl.pallas_call(
        kernel,
        grid=(2, nT),
        in_specs=in_specs,
        out_specs=out_specs,
        out_shape=out_shape,
        scratch_shapes=[
            pltpu.VMEM((B, H), jnp.float32),   # h state
            pltpu.VMEM((B, H), jnp.float32),   # c state
        ],
        compiler_params=pltpu.CompilerParams(
            dimension_semantics=("parallel", "arbitrary")),
    )(gx, mask, whh)


# ----------------------------------------------------------------------------
# Kernel 3: miss_linear + concat + linear1 + ReLU + linear2 (fused head).
# cat([hidden, miss]) @ W1^T is decomposed as hidden @ W1h^T + miss @ W1m^T.
# Output is padded to 128 lanes; sliced to 26 outside.
# ----------------------------------------------------------------------------
def head_kernel(hid_ref, wr_ref, wm_ref, bm_ref, w1h_ref, w1m_ref, b1_ref,
                w2_ref, b2_ref, out_ref):
    hid = hid_ref[...].astype(jnp.bfloat16)
    wr = wr_ref[...].astype(jnp.bfloat16)
    miss = (jnp.dot(wr, wm_ref[...], preferred_element_type=jnp.float32)
            + bm_ref[...])                                   # (B, 256)
    h1 = (jnp.dot(hid, w1h_ref[...], preferred_element_type=jnp.float32)
          + jnp.dot(miss.astype(jnp.bfloat16), w1m_ref[...],
                    preferred_element_type=jnp.float32)
          + b1_ref[...])                                     # (B, 256)
    h1 = jnp.maximum(h1, 0.0)                                # ReLU
    out_ref[...] = (jnp.dot(h1.astype(jnp.bfloat16), w2_ref[...],
                            preferred_element_type=jnp.float32)
                    + b2_ref[...])                           # (B, 128) padded


def run_head(hidden_cat, wr, hp):
    B = hidden_cat.shape[0]
    args = (hidden_cat, wr, hp["wmT"], hp["bm"], hp["w1hT"], hp["w1mT"],
            hp["b1"], hp["w2T"], hp["b2"])
    # bind ndim at definition time (no late-binding of `a` in the lambda)
    in_specs = [pl.BlockSpec(a.shape, lambda i, n=a.ndim: (0,) * n)
                for a in args]
    return pl.pallas_call(
        head_kernel,
        grid=(1,),
        in_specs=in_specs,
        out_specs=pl.BlockSpec((B, HEAD_PAD), lambda i: (0, 0)),
        out_shape=jax.ShapeDtypeStruct((B, HEAD_PAD), jnp.float32),
        compiler_params=pltpu.CompilerParams(
            dimension_semantics=("arbitrary",)),
    )(*args)


# ----------------------------------------------------------------------------
# Full forward (glue in plain JAX, hot paths in Pallas).
# ----------------------------------------------------------------------------
def rnn_forward(params, x_in, wr_guess, x_lens):
    # x_in: (B, T, 27) f32 batch-first ; wr_guess: (B, 1, 26) ; x_lens: (B,)
    B, T, _ = x_in.shape
    x_tbd = jnp.transpose(x_in, (1, 0, 2))              # (T, B, D) time-major
    # per-step validity mask (packed-sequence semantics), built once
    mask = (jnp.arange(T, dtype=jnp.int32)[:, None]
            < x_lens.astype(jnp.int32)[None, :]).astype(jnp.float32)
    mask = mask[:, :, None]                             # (T, B, 1)

    layer_x = x_tbd.astype(jnp.bfloat16)                # bf16 matmul operands
    hfin = None
    for layer in range(NUM_LAYERS):
        p = params["lstm"][layer]
        d_in = layer_x.shape[-1]
        gx = run_input_proj(layer_x.reshape(T * B, d_in), p["wih"], p["b"])
        gx = gx.reshape(2, T, B, 4 * HIDDEN)
        if layer < NUM_LAYERS - 1:
            hseq, hfin = run_lstm_recurrent(gx, mask, p["whh"], emit_hseq=True)
            layer_x = hseq                              # (T, B, 2H) bf16 fwd|bwd
        else:
            hfin = run_lstm_recurrent(gx, mask, p["whh"], emit_hseq=False)
        # TODO(synk): inter-layer dropout (p=0.3) is training-only; inference semantics used.

    # hidden[-1] -> permute(1,0,2) -> view(B, 2H) == [fwd_final | bwd_final]
    wr = wr_guess.reshape(B, N_VOCAB)                   # squeeze(1)
    out_pad = run_head(hfin, wr, params["head"])        # (B, 128) lane-dense
    return out_pad[:, :N_VOCAB]                         # (B, 26)


# ----------------------------------------------------------------------------
# Deterministic parameter init (shapes per the PyTorch module __init__).
# ----------------------------------------------------------------------------
def init_params(key):
    keys = jax.random.split(key, 32)
    ki = iter(keys)

    def u(k, shape, bound):
        return jax.random.uniform(k, shape, jnp.float32, -bound, bound)

    params = {"lstm": []}
    lstm_bound = 1.0 / (HIDDEN ** 0.5)
    for layer in range(NUM_LAYERS):
        d_in = INPUT_DIM if layer == 0 else 2 * HIDDEN
        wih_list, whh_list, b_list = [], [], []
        for _tag in ("fwd", "bwd"):
            wih = u(next(ki), (4 * HIDDEN, d_in), lstm_bound)
            whh = u(next(ki), (4 * HIDDEN, HIDDEN), lstm_bound)
            bih = u(next(ki), (4 * HIDDEN,), lstm_bound)
            bhh = u(next(ki), (4 * HIDDEN,), lstm_bound)
            wih_list.append(wih.T)                       # (d_in, 4H)
            whh_list.append(whh.T)                       # (H, 4H)
            b_list.append((bih + bhh).reshape(1, 4 * HIDDEN))
        params["lstm"].append(dict(
            wih=jnp.stack(wih_list).astype(jnp.bfloat16),    # (2, d_in, 4H)
            whh=jnp.stack(whh_list).astype(jnp.bfloat16),    # (2, H, 4H)
            b=jnp.stack(b_list)))                            # (2, 1, 4H) f32

    bm_bound = 1.0 / (N_VOCAB ** 0.5)
    wm = u(next(ki), (MID, N_VOCAB), bm_bound)          # miss_linear: 26 -> 256
    bm = u(next(ki), (MID,), bm_bound)
    b1_bound = 1.0 / (IN_FEAT ** 0.5)
    w1 = u(next(ki), (MID, IN_FEAT), b1_bound)          # linear1_out: 1280 -> 256
    b1 = u(next(ki), (MID,), b1_bound)
    b2_bound = 1.0 / (MID ** 0.5)
    w2 = u(next(ki), (N_VOCAB, MID), b2_bound)          # linear2_out: 256 -> 26
    b2 = u(next(ki), (N_VOCAB,), b2_bound)

    w1T = w1.T                                          # (1280, 256)
    w2T_pad = jnp.zeros((MID, HEAD_PAD), jnp.float32).at[:, :N_VOCAB].set(w2.T)
    b2_pad = jnp.zeros((1, HEAD_PAD), jnp.float32).at[:, :N_VOCAB].set(b2)
    params["head"] = dict(
        wmT=wm.T.astype(jnp.bfloat16), bm=bm.reshape(1, MID),
        w1hT=w1T[:2 * HIDDEN, :].astype(jnp.bfloat16),
        w1mT=w1T[2 * HIDDEN:, :].astype(jnp.bfloat16),
        b1=b1.reshape(1, MID),
        w2T=w2T_pad.astype(jnp.bfloat16), b2=b2_pad)
    return params


if __name__ == "__main__":
    key = jax.random.PRNGKey(0)
    k_p, k_x, k_w = jax.random.split(key, 3)

    params = init_params(k_p)

    B, T = 2, 8
    x_in = jax.random.normal(k_x, (B, T, INPUT_DIM), jnp.float32)
    wr_guess = jax.random.normal(k_w, (B, 1, N_VOCAB), jnp.float32)
    x_lens = jnp.array([8, 5], dtype=jnp.int32)

    out = rnn_forward(params, x_in, wr_guess, x_lens)
    out = jax.block_until_ready(out)

    assert out.shape == (B, N_VOCAB), out.shape
    assert bool(jnp.all(jnp.isfinite(out)))
    print("KERNEL_OK")
</pallas_src>

<mosaic_0001>
module attributes {stable_mosaic.version = 11 : i64} {
  func.func @input_proj_kernel(%arg0: i32, %arg1: memref<16x27xbf16, #tpu.memory_space<vmem>>, %arg2: memref<1x27x2048xbf16, #tpu.memory_space<vmem>>, %arg3: memref<1x1x2048xf32, #tpu.memory_space<vmem>>, %arg4: memref<1x16x2048xf32, #tpu.memory_space<vmem>>) attributes {dimension_semantics = [#tpu.dimension_semantics<parallel>], iteration_bounds = array<i64: 2>, scalar_prefetch = 0 : i64, scratch_operands = 0 : i64, tpu.core_type = #tpu.core_type<tc>, window_params = [{pipeline_mode = #tpu.pipeline_mode<synchronous>, transform_indices = @transform_0, window_bounds = array<i64: 16, 27>}, {transform_indices = @transform_1, window_bounds = array<i64: 1, 27, 2048>}, {transform_indices = @transform_2, window_bounds = array<i64: 1, 1, 2048>}, {transform_indices = @transform_3, window_bounds = array<i64: 1, 16, 2048>}]} {
    %c0 = arith.constant 0 : index
    %c0_0 = arith.constant 0 : index
    %0 = vector.load %arg1[%c0, %c0_0] : memref<16x27xbf16, #tpu.memory_space<vmem>>, vector<16x27xbf16>
    %c0_1 = arith.constant 0 : index
    %c0_2 = arith.constant 0 : index
    %c0_3 = arith.constant 0 : index
    %1 = vector.load %arg2[%c0_1, %c0_2, %c0_3] : memref<1x27x2048xbf16, #tpu.memory_space<vmem>>, vector<1x27x2048xbf16>
    %2 = vector.shape_cast %1 : vector<1x27x2048xbf16> to vector<27x2048xbf16>
    %cst = arith.constant dense<0.000000e+00> : vector<16x2048xf32>
    %3 = tpu.matmul %0, %2, %cst {dimension_numbers = #tpu.dot_dimension_numbers<[1], [0], [0], [1], [0, 0, 1, 1], [], []>} : vector<16x27xbf16>, vector<27x2048xbf16>, vector<16x2048xf32> -> vector<16x2048xf32>
    %c0_4 = arith.constant 0 : index
    %c0_5 = arith.constant 0 : index
    %c0_6 = arith.constant 0 : index
    %4 = vector.load %arg3[%c0_4, %c0_5, %c0_6] : memref<1x1x2048xf32, #tpu.memory_space<vmem>>, vector<1x1x2048xf32>
    %5 = vector.shape_cast %4 : vector<1x1x2048xf32> to vector<1x2048xf32>
    %6 = vector.broadcast %5 : vector<1x2048xf32> to vector<16x2048xf32>
    %7 = arith.addf %3, %6 : vector<16x2048xf32>
    %c0_7 = arith.constant 0 : index
    %c0_8 = arith.constant 0 : index
    %c0_9 = arith.constant 0 : index
    %8 = vector.load %arg4[%c0_7, %c0_8, %c0_9] : memref<1x16x2048xf32, #tpu.memory_space<vmem>>, vector<1x16x2048xf32>
    %9 = vector.shape_cast %8 : vector<1x16x2048xf32> to vector<16x2048xf32>
    %10 = vector.shape_cast %7 : vector<16x2048xf32> to vector<1x16x2048xf32>
    tpu.vector_store %arg4[%c0_7, %c0_8, %c0_9], %10 {strides = array<i32>} : memref<1x16x2048xf32, #tpu.memory_space<vmem>>, vector<1x16x2048xf32>,
    return
  }
  func.func @transform_0(%arg0: i32) -> (i32, i32) {
    %c0_i32 = arith.constant 0 : i32
    %c0_i32_0 = arith.constant 0 : i32
    %c0_i32_1 = arith.constant 0 : i32
    return %c0_i32, %c0_i32_0 : i32, i32
  }
  func.func @transform_1(%arg0: i32) -> (i32, i32, i32) {
    %c0_i32 = arith.constant 0 : i32
    %c0_i32_0 = arith.constant 0 : i32
    %c0_i32_1 = arith.constant 0 : i32
    return %arg0, %c0_i32, %c0_i32_0 : i32, i32, i32
  }
  func.func @transform_2(%arg0: i32) -> (i32, i32, i32) {
    %c0_i32 = arith.constant 0 : i32
    %c0_i32_0 = arith.constant 0 : i32
    %c0_i32_1 = arith.constant 0 : i32
    return %arg0, %c0_i32, %c0_i32_0 : i32, i32, i32
  }
  func.func @transform_3(%arg0: i32) -> (i32, i32, i32) {
    %c0_i32 = arith.constant 0 : i32
    %c0_i32_0 = arith.constant 0 : i32
    %c0_i32_1 = arith.constant 0 : i32
    return %arg0, %c0_i32, %c0_i32_0 : i32, i32, i32
  }
}

</mosaic_0001>

<llo_original>
// kernel: tpu_custom_call.1
$region0: #{tpu_custom_call.1}
  #allocation0 [shape = 'u32[]', space=smem, size = 0x4, offset = 0x4, fixed_abs, tag = 'smem constant byte address 0x4 - core index']
  #allocation1 [shape = 'u32[144,128]{1,0:T(1,128)}', space=vmem, size = 0x12000, scoped, tag = 'internal scratch']
  %s0 = inlined_call_operand.vmem [shape: bf16[16,27], index: 0, kind: input, shape index: {}]
  %s1 = inlined_call_operand.vmem [shape: bf16[2,27,2048], index: 1, kind: input, shape index: {}]
  %s2 = inlined_call_operand.vmem [shape: f32[2,1,2048], index: 2, kind: input, shape index: {}]
  %s3 = inlined_call_operand.hbm [shape: f32[2,16,2048], index: 3, kind: output, shape index: {}]
  %s4 = sld [smem:[#allocation0]]
  $region45: #{tpu_custom_call.1} parent=0
    _
  %s6 = ssub.s32 1, %s4
  %s7 = scalar_select 0, %s6, %s4
  $region1: #{tpu_custom_call.1} parent=0
    #allocation2 [shape = 'u8[262144]{0}', space=vmem, size = 0x40000, scoped, tag = 'output window, operand 0']
    #allocation3 [shape = 's32[2]{0}', space=sflag, size = 0x8, scoped, tag = 'scoped memory for tpu_custom_call.1']
    %8 = vsyncpa [#allocation3], 0
    %s9 = scalar_lea.sflag [#allocation3], 1
    %10 = vsyncpa %s9, 0
    loop: start=0, step=1, limit=4
    $region2: #{tpu_custom_call.1} parent=1 // loop_pre_header
      _
    $region3: #{tpu_custom_call.1} parent=1 // loop_header
      %s12 = sphi 0, %s16
      %p13 = scmp.ge.s32.totalorder %s12, 4
      %s20 = sphi 0, %s20
      %s22 = sphi 0, %s20
      %s23 = sphi 0, %s22
      %s37 = sphi 0, %s23
      %s43 = sphi 0, %s45
      %s46 = sphi 0, %s43
      %s47 = sphi 0, %s46
      %s63 = sphi 0, %s47
      %s69 = sphi 0, %s71
      %s72 = sphi 0, %s69
      %s73 = sphi 0, %s72
      %s89 = sphi 0, %s73
      %s95 = sphi 0, %s97
      %s98 = sphi 0, %s95
      %s99 = sphi 0, %s98
      %s115 = sphi 0, %s99
    $region4: #{tpu_custom_call.1} parent=1 // loop_header_branch
      %15 = sbr.rel (%p13) target = $region8
    $region5: #{tpu_custom_call.1} parent=1 // loop_body
      %s17 = ssub.s32 %s12, 1
      %s18 = ssub.s32 %s12, 2
      %s19 = sadd.s32 %s12, 1
      %s21 = sadd.s32 %s20, 1
      %p24 = scmp.eq.s32.totalorder %s12, 1
      %p25 = scmp.ne.s32.totalorder %s20, %s22
      %p26 = scmp.eq.s32.totalorder %s12, 0
      %p27 = por %p25, %p26
      %p28 = scmp.ne.s32.totalorder %s20, %s22
      %p29 = scmp.eq.s32.totalorder %s17, 1
      %p30 = por %p28, %p29
      %p31 = scmp.ne.s32.totalorder %s22, %s23
      %p32 = scmp.eq.s32.totalorder %s17, 0
      %p33 = por %p31, %p32
      %p34 = scmp.ne.s32.totalorder %s22, %s23
      %p35 = scmp.eq.s32.totalorder %s18, 1
      %p36 = por %p34, %p35
      %p38 = scmp.ne.s32.totalorder %s23, %s37
      %p39 = scmp.eq.s32.totalorder %s18, 0
      %p40 = por %p38, %p39
      %s41 = ssub.s32 %s12, %s19
      %p42 = scmp.eq.s32.totalorder %s41, 0
      %s44 = sadd.s32 %s43, 1
      %s45 = scalar_select %p42, %s43, %s44
      %p48 = pneg %p42
      %p49 = scmp.eq.s32.totalorder %s12, 1
      %p50 = por %p48, %p49
      %p51 = scmp.ne.s32.totalorder %s43, %s46
      %p52 = scmp.eq.s32.totalorder %s12, 0
      %p53 = por %p51, %p52
      %p54 = scmp.ne.s32.totalorder %s43, %s46
      %p55 = scmp.eq.s32.totalorder %s17, 1
      %p56 = por %p54, %p55
      %p57 = scmp.ne.s32.totalorder %s46, %s47
      %p58 = scmp.eq.s32.totalorder %s17, 0
      %p59 = por %p57, %p58
      %p60 = scmp.ne.s32.totalorder %s46, %s47
      %p61 = scmp.eq.s32.totalorder %s18, 1
      %p62 = por %p60, %p61
      %p64 = scmp.ne.s32.totalorder %s47, %s63
      %p65 = scmp.eq.s32.totalorder %s18, 0
      %p66 = por %p64, %p65
      %s67 = ssub.s32 %s12, %s19
      %p68 = scmp.eq.s32.totalorder %s67, 0
      %s70 = sadd.s32 %s69, 1
      %s71 = scalar_select %p68, %s69, %s70
      %p74 = pneg %p68
      %p75 = scmp.eq.s32.totalorder %s12, 1
      %p76 = por %p74, %p75
      %p77 = scmp.ne.s32.totalorder %s69, %s72
      %p78 = scmp.eq.s32.totalorder %s12, 0
      %p79 = por %p77, %p78
      %p80 = scmp.ne.s32.totalorder %s69, %s72
      %p81 = scmp.eq.s32.totalorder %s17, 1
      %p82 = por %p80, %p81
      %p83 = scmp.ne.s32.totalorder %s72, %s73
      %p84 = scmp.eq.s32.totalorder %s17, 0
      %p85 = por %p83, %p84
      %p86 = scmp.ne.s32.totalorder %s72, %s73
      %p87 = scmp.eq.s32.totalorder %s18, 1
      %p88 = por %p86, %p87
      %p90 = scmp.ne.s32.totalorder %s73, %s89
      %p91 = scmp.eq.s32.totalorder %s18, 0
      %p92 = por %p90, %p91
      %s93 = ssub.s32 %s12, %s19
      %p94 = scmp.eq.s32.totalorder %s93, 0
      %s96 = sadd.s32 %s95, 1
      %s97 = scalar_select %p94, %s95, %s96
      %p100 = pneg %p94
      %p101 = scmp.eq.s32.totalorder %s12, 1
      %p102 = por %p100, %p101
      %p103 = scmp.ne.s32.totalorder %s95, %s98
      %p104 = scmp.eq.s32.totalorder %s12, 0
      %p105 = por %p103, %p104
      %p106 = scmp.ne.s32.totalorder %s95, %s98
      %p107 = scmp.eq.s32.totalorder %s17, 1
      %p108 = por %p106, %p107
      %p109 = scmp.ne.s32.totalorder %s98, %s99
      %p110 = scmp.eq.s32.totalorder %s17, 0
      %p111 = por %p109, %p110
      %p112 = scmp.ne.s32.totalorder %s98, %s99
      %p113 = scmp.eq.s32.totalorder %s18, 1
      %p114 = por %p112, %p113
      %p116 = scmp.ne.s32.totalorder %s99, %s115
      %p117 = scmp.eq.s32.totalorder %s18, 0
      %p118 = por %p116, %p117
      %p119 = scmp.le.s32.totalorder 1, %s12
      %p120 = scmp.lt.s32.totalorder %s12, 3
      %p121 = pnand %p119, %p120
      %p122 = pneg %p121
      // Predicated region
      $region9: #{tpu_custom_call.1} parent=5 // pred_check
        _
      $region10: #{tpu_custom_call.1} parent=5 // pred_check_branch
        %124 = sbr.rel (%p121) target = $region12
      $region11: #{tpu_custom_call.1} parent=5 // pred_region
        %s125 = ssub.s32 %s12, 1
        // Predicated region
        $region13: #{tpu_custom_call.1} parent=11 // pred_check
          %p126 = pneg %p33
        $region14: #{tpu_custom_call.1} parent=11 // pred_check_branch
          %128 = sbr.rel (%p126) target = $region16
        $region15: #{tpu_custom_call.1} parent=11 // pred_region
          _
        $region16: #{tpu_custom_call.1} parent=11 // pred_fallthru
          _
      $region12: #{tpu_custom_call.1} parent=5 // pred_fallthru
        _
      %p129 = scmp.lt.s32.totalorder %s12, 2
      // Predicated region
      $region17: #{tpu_custom_call.1} parent=5 // pred_check
        %p130 = pneg %p129
      $region18: #{tpu_custom_call.1} parent=5 // pred_check_branch
        %132 = sbr.rel (%p130) target = $region20
      $region19: #{tpu_custom_call.1} parent=5 // pred_region
        // Predicated region
        $region21: #{tpu_custom_call.1} parent=19 // pred_check
          %p133 = pneg %p53
        $region22: #{tpu_custom_call.1} parent=19 // pred_check_branch
          %135 = sbr.rel (%p133) target = $region24
        $region23: #{tpu_custom_call.1} parent=19 // pred_region
          %p136 = scmp.lt.s32.totalorder %s12, 1
          %s137 = scalar_select %p136, %s12, 1
          %s138 = smul.addr %s137, 64
          %s139 = smul.addr %s138, 4
          %s140 = scalar_lea.vmem %s1, %s139
        $region24: #{tpu_custom_call.1} parent=19 // pred_fallthru
          _
        // Predicated region
        $region25: #{tpu_custom_call.1} parent=19 // pred_check
          %p141 = pneg %p79
        $region26: #{tpu_custom_call.1} parent=19 // pred_check_branch
          %143 = sbr.rel (%p141) target = $region28
        $region27: #{tpu_custom_call.1} parent=19 // pred_region
          %p144 = scmp.lt.s32.totalorder %s12, 1
          %s145 = scalar_select %p144, %s12, 1
          %s146 = smul.addr %s145, 16
          %s147 = scalar_lea.vmem %s2, %s146
        $region28: #{tpu_custom_call.1} parent=19 // pred_fallthru
          _
      $region20: #{tpu_custom_call.1} parent=5 // pred_fallthru
        _
      %p148 = scmp.le.s32.totalorder 1, %s12
      %p149 = scmp.lt.s32.totalorder %s12, 3
      %p150 = pnand %p148, %p149
      %p151 = pneg %p150
      // Predicated region
      $region29: #{tpu_custom_call.1} parent=5 // pred_check
        _
      $region30: #{tpu_custom_call.1} parent=5 // pred_check_branch
        %153 = sbr.rel (%p150) target = $region32
      $region31: #{tpu_custom_call.1} parent=5 // pred_region
        %s154 = ssub.s32 %s12, 1
        %p155 = pneg %p33
        %p156 = pneg %p30
        %p157 = scmp.lt.s32.totalorder %s17, 1
        %s158 = scalar_select %p157, %s17, 1
        %s159 = smul.addr %s158, 64
        %s160 = smul.addr %s159, 4
        %s161 = scalar_lea.vmem %s1, %s160
        %p162 = pneg %p59
        %p163 = pneg %p56
        %p164 = scmp.lt.s32.totalorder %s17, 1
        %s165 = scalar_select %p164, %s17, 1
        %s166 = smul.addr %s165, 16
        %s167 = scalar_lea.vmem %s2, %s166
        %p168 = pneg %p85
        %p169 = pneg %p82
        %p170 = pneg %p111
        %p171 = pneg %p108
        %s172 = sand.u32 %s98, 1
        %s173 = scalar_lea.sflag [#allocation3], %s172
        %s174 = sand.u32 %s98, 1
        %s175 = smul.addr %s174, 256
        %s176 = scalar_lea.vmem [#allocation2], %s175
        %p177 = scmp.lt.s32.totalorder %s17, 1
        %s178 = scalar_select %p177, %s17, 1
        %s179 = smul.addr %s178, 64
        %s180 = smul.addr %s179, 4
        %s181 = scalar_lea.vmem %s1, %s180
        %p182 = scmp.lt.s32.totalorder %s17, 1
        %s183 = scalar_select %p182, %s17, 1
        %s184 = smul.addr %s183, 16
        %s185 = scalar_lea.vmem %s2, %s184
        %v187 = vld [vmem:[%s0] sm:$0xf]
        %v188 = vld [vmem:[%s0 + $0x4] sm:$0xf]
        %v189 = vld [vmem:[%s181] sm:$0xff]
        %v190 = vld [vmem:[%s181 + $0x8] sm:$0xff]
        %v191 = vld [vmem:[%s181 + $0x10] sm:$0xff]
        %v192 = vld [vmem:[%s181 + $0x18] sm:$0xff]
        %v193 = vld [vmem:[%s181 + $0x20] sm:$0xff]
        %v194 = vld [vmem:[%s181 + $0x28] sm:$0xff]
        %v195 = vld [vmem:[%s181 + $0x30] sm:$0xff]
        %v196 = vld [vmem:[%s181 + $0x38] sm:$0xff]
        %v197 = vld [vmem:[%s181 + $0x40] sm:$0xff]
        %v198 = vld [vmem:[%s181 + $0x48] sm:$0xff]
        %v199 = vld [vmem:[%s181 + $0x50] sm:$0xff]
        %v200 = vld [vmem:[%s181 + $0x58] sm:$0xff]
        %v201 = vld [vmem:[%s181 + $0x60] sm:$0xff]
        %v202 = vld [vmem:[%s181 + $0x68] sm:$0xff]
        %v203 = vld [vmem:[%s181 + $0x70] sm:$0xff]
        %v204 = vld [vmem:[%s181 + $0x78] sm:$0xff]
        %v205 = vld [vmem:[%s181 + $0x80] sm:$0xff]
        %v206 = vld [vmem:[%s181 + $0x88] sm:$0xff]
        %v207 = vld [vmem:[%s181 + $0x90] sm:$0xff]
        %v208 = vld [vmem:[%s181 + $0x98] sm:$0xff]
        %v209 = vld [vmem:[%s181 + $0xa0] sm:$0xff]
        %v210 = vld [vmem:[%s181 + $0xa8] sm:$0xff]
        %v211 = vld [vmem:[%s181 + $0xb0] sm:$0xff]
        %v212 = vld [vmem:[%s181 + $0xb8] sm:$0xff]
        %v213 = vld [vmem:[%s181 + $0xc0] sm:$0x33]
        %v214 = vld [vmem:[%s181 + $0xc8] sm:$0x33]
        %v215 = vld [vmem:[%s181 + $0xd0] sm:$0x33]
        %v216 = vld [vmem:[%s181 + $0xd8] sm:$0x33]
        %v217 = vld [vmem:[%s181 + $0xe0] sm:$0x33]
        %v218 = vld [vmem:[%s181 + $0xe8] sm:$0x33]
        %v219 = vld [vmem:[%s181 + $0xf0] sm:$0x33]
        %v220 = vld [vmem:[%s181 + $0xf8] sm:$0x33]
        %v221 = vld [vmem:[%s185] sm:$0xff]
        %v222 = vld [vmem:[%s185 + $0x8] sm:$0xff]
        %v225 = vlaneseq
        %v226 = vshrl.u32 %v225, 7
        %v227 = vsub.s32 0, %v226
        %v228 = vrot.slane %v221, %v227
        %v229 = vlaneseq
        %v230 = vshrl.u32 %v229, 7
        %v231 = vsub.s32 1, %v230
        %v232 = vrot.slane %v221, %v231
        %v233 = vlaneseq
        %v234 = vshrl.u32 %v233, 7
        %v235 = vsub.s32 2, %v234
        %v236 = vrot.slane %v221, %v235
        %v237 = vlaneseq
        %v238 = vshrl.u32 %v237, 7
        %v239 = vsub.s32 3, %v238
        %v240 = vrot.slane %v221, %v239
        %v241 = vlaneseq
        %v242 = vshrl.u32 %v241, 7
        %v243 = vsub.s32 4, %v242
        %v244 = vrot.slane %v221, %v243
        %v245 = vlaneseq
        %v246 = vshrl.u32 %v245, 7
        %v247 = vsub.s32 5, %v246
        %v248 = vrot.slane %v221, %v247
        %v249 = vlaneseq
        %v250 = vshrl.u32 %v249, 7
        %v251 = vsub.s32 6, %v250
        %v252 = vrot.slane %v221, %v251
        %v253 = vlaneseq
        %v254 = vshrl.u32 %v253, 7
        %v255 = vsub.s32 7, %v254
        %v256 = vrot.slane %v221, %v255
        %v257 = vlaneseq
        %v258 = vshrl.u32 %v257, 7
        %v259 = vsub.s32 0, %v258
        %v260 = vrot.slane %v222, %v259
        %v261 = vlaneseq
        %v262 = vshrl.u32 %v261, 7
        %v263 = vsub.s32 1, %v262
        %v264 = vrot.slane %v222, %v263
        %v265 = vlaneseq
        %v266 = vshrl.u32 %v265, 7
        %v267 = vsub.s32 2, %v266
        %v268 = vrot.slane %v222, %v267
        %v269 = vlaneseq
        %v270 = vshrl.u32 %v269, 7
        %v271 = vsub.s32 3, %v270
        %v272 = vrot.slane %v222, %v271
        %v273 = vlaneseq
        %v274 = vshrl.u32 %v273, 7
        %v275 = vsub.s32 4, %v274
        %v276 = vrot.slane %v222, %v275
        %v277 = vlaneseq
        %v278 = vshrl.u32 %v277, 7
        %v279 = vsub.s32 5, %v278
        %v280 = vrot.slane %v222, %v279
        %v281 = vlaneseq
        %v282 = vshrl.u32 %v281, 7
        %v283 = vsub.s32 6, %v282
        %v284 = vrot.slane %v222, %v283
        %v285 = vlaneseq
        %v286 = vshrl.u32 %v285, 7
        %v287 = vsub.s32 7, %v286
        %v288 = vrot.slane %v222, %v287
        %v307 = vunpack.c.l.b16 %v187
        %v308 = vunpack.c.l.b16 %v188
        %v309 = vpack.c.b16 %v308, %v307
        %v342 = vunpack.c.l.b16 %v189
        %v343 = vunpack.c.h.b16 %v189
        %v344 = vunpack.c.l.b16 %v190
        %v345 = vunpack.c.h.b16 %v190
        %v346 = vunpack.c.l.b16 %v191
        %v347 = vunpack.c.h.b16 %v191
        %v348 = vunpack.c.l.b16 %v192
        %v349 = vunpack.c.h.b16 %v192
        %v350 = vunpack.c.l.b16 %v193
        %v351 = vunpack.c.h.b16 %v193
        %v352 = vunpack.c.l.b16 %v194
        %v353 = vunpack.c.h.b16 %v194
        %v354 = vunpack.c.l.b16 %v195
        %v355 = vunpack.c.h.b16 %v195
        %v356 = vunpack.c.l.b16 %v196
        %v357 = vunpack.c.h.b16 %v196
        %v358 = vunpack.c.l.b16 %v197
        %v359 = vunpack.c.h.b16 %v197
        %v360 = vunpack.c.l.b16 %v198
        %v361 = vunpack.c.h.b16 %v198
        %v362 = vunpack.c.l.b16 %v199
        %v363 = vunpack.c.h.b16 %v199
        %v364 = vunpack.c.l.b16 %v200
        %v365 = vunpack.c.h.b16 %v200
        %v366 = vunpack.c.l.b16 %v201
        %v367 = vunpack.c.h.b16 %v201
        %v368 = vunpack.c.l.b16 %v202
        %v369 = vunpack.c.h.b16 %v202
        %v370 = vunpack.c.l.b16 %v203
        %v371 = vunpack.c.h.b16 %v203
        %v372 = vunpack.c.l.b16 %v204
        %v373 = vunpack.c.h.b16 %v204
        %v374 = vunpack.c.l.b16 %v205
        %v375 = vunpack.c.h.b16 %v205
        %v376 = vunpack.c.l.b16 %v206
        %v377 = vunpack.c.h.b16 %v206
        %v378 = vunpack.c.l.b16 %v207
        %v379 = vunpack.c.h.b16 %v207
        %v380 = vunpack.c.l.b16 %v208
        %v381 = vunpack.c.h.b16 %v208
        %v382 = vunpack.c.l.b16 %v209
        %v383 = vunpack.c.h.b16 %v209
        %v384 = vunpack.c.l.b16 %v210
        %v385 = vunpack.c.h.b16 %v210
        %v386 = vunpack.c.l.b16 %v211
        %v387 = vunpack.c.h.b16 %v211
        %v388 = vunpack.c.l.b16 %v212
        %v389 = vunpack.c.h.b16 %v212
        %v390 = vunpack.c.l.b16 %v213
        %v391 = vunpack.c.h.b16 %v213
        %v392 = vunpack.c.l.b16 %v214
        %v393 = vunpack.c.h.b16 %v214
        %v394 = vunpack.c.l.b16 %v215
        %v395 = vunpack.c.h.b16 %v215
        %v396 = vunpack.c.l.b16 %v216
        %v397 = vunpack.c.h.b16 %v216
        %v398 = vunpack.c.l.b16 %v217
        %v399 = vunpack.c.h.b16 %v217
        %v400 = vunpack.c.l.b16 %v218
        %v401 = vunpack.c.h.b16 %v218
        %v402 = vunpack.c.l.b16 %v219
        %v403 = vunpack.c.h.b16 %v219
        %v404 = vunpack.c.l.b16 %v220
        %v405 = vunpack.c.h.b16 %v220
        %v406 = vpack.c.b16 %v358, %v342
        %v407 = vpack.c.b16 %v359, %v343
        %v408 = vpack.c.b16 %v360, %v344
        %v409 = vpack.c.b16 %v361, %v345
        %v410 = vpack.c.b16 %v362, %v346
        %v411 = vpack.c.b16 %v363, %v347
        %v412 = vpack.c.b16 %v364, %v348
        %v413 = vpack.c.b16 %v365, %v349
        %v414 = vpack.c.b16 %v366, %v350
        %v415 = vpack.c.b16 %v367, %v351
        %v416 = vpack.c.b16 %v368, %v352
        %v417 = vpack.c.b16 %v369, %v353
        %v418 = vpack.c.b16 %v370, %v354
        %v419 = vpack.c.b16 %v371, %v355
        %v420 = vpack.c.b16 %v372, %v356
        %v421 = vpack.c.b16 %v373, %v357
        %v422 = vpack.c.b16 %v390, %v374
        %v423 = vpack.c.b16 %v391, %v375
        %v424 = vpack.c.b16 %v392, %v376
        %v425 = vpack.c.b16 %v393, %v377
        %v426 = vpack.c.b16 %v394, %v378
        %v427 = vpack.c.b16 %v395, %v379
        %v428 = vpack.c.b16 %v396, %v380
        %v429 = vpack.c.b16 %v397, %v381
        %v430 = vpack.c.b16 %v398, %v382
        %v431 = vpack.c.b16 %v399, %v383
        %v432 = vpack.c.b16 %v400, %v384
        %v433 = vpack.c.b16 %v401, %v385
        %v434 = vpack.c.b16 %v402, %v386
        %v435 = vpack.c.b16 %v403, %v387
        %v436 = vpack.c.b16 %v404, %v388
        %v437 = vpack.c.b16 %v405, %v389
        %vm454 = vcmask 220160
        %v456 = vsel %vm454, %v309, 0
        %vm458 = vcmask 1044480
        %vm459 = vcmask 1045504
        %v460 = vsel %vm458, 4294967295, 65535
        %v461 = vsel %vm459, %v460, 0
        %v463 = vand.u32 %v422, %v461
        %v466 = vand.u32 %v423, %v461
        %v469 = vand.u32 %v424, %v461
        %v472 = vand.u32 %v425, %v461
        %v475 = vand.u32 %v426, %v461
        %v478 = vand.u32 %v427, %v461
        %v481 = vand.u32 %v428, %v461
        %v484 = vand.u32 %v429, %v461
        %v487 = vand.u32 %v430, %v461
        %v490 = vand.u32 %v431, %v461
        %v493 = vand.u32 %v432, %v461
        %v496 = vand.u32 %v433, %v461
        %v499 = vand.u32 %v434, %v461
        %v502 = vand.u32 %v435, %v461
        %v505 = vand.u32 %v436, %v461
        %v508 = vand.u32 %v437, %v461
        %510 = vmatprep.subr.bf16.mxu0 0
        %511 = vmatpush1.bf16.msra.mxu0 0
        %512 = vmatprep.subr.bf16.mxu0 0
        %513 = vmatpush1.bf16.msra.mxu0 0
        %514 = vmatprep.subr.bf16.mxu0 0
        %515 = vmatpush1.bf16.msra.mxu0 0
        %516 = vmatprep.subr.bf16.mxu0 0
        %517 = vmatpush1.bf16.msra.mxu0 0
        %518 = vmatprep.subr.bf16.mxu0 0
        %519 = vmatpush1.bf16.msra.mxu0 0
        %520 = vmatprep.subr.bf16.mxu0 0
        %521 = vmatpush1.bf16.msra.mxu0 0
        %522 = vmatprep.subr.bf16.mxu0 %v466
        %523 = vmatpush1.bf16.msra.mxu0 %v463
        %524 = vmatprep.subr.bf16.mxu0 %v407
        %525 = vmatpush1.bf16.msra.mxu0 %v406
        %526 = vmatprep.subr.bf16.mxu0 0
        %527 = vmatpush2.bf16.msra.mxu0 0
        %528 = vmatprep.subr.bf16.mxu0 0
        %529 = vmatpush2.bf16.msra.mxu0 0
        %530 = vmatprep.subr.bf16.mxu0 0
        %531 = vmatpush2.bf16.msra.mxu0 0
        %532 = vmatprep.subr.bf16.mxu0 0
        %533 = vmatpush2.bf16.msra.mxu0 0
        %534 = vmatprep.subr.bf16.mxu0 0
        %535 = vmatpush2.bf16.msra.mxu0 0
        %536 = vmatprep.subr.bf16.mxu0 0
        %537 = vmatpush2.bf16.msra.mxu0 0
        %538 = vmatprep.subr.bf16.mxu0 0
        %539 = vmatpush2.bf16.msra.mxu0 0
        %540 = vmatprep.subr.bf16.mxu0 0
        %541 = vmatpush2.bf16.msra.mxu0 0
        %542 = vmatprep.mubr.bf16.mxu0 0
        %543 = vmatmul.mubr.bf16.gmra.mxu0 %v456
        %v544 = vpop.f32.mrf.mxu0
        %v545 = vadd.f32 %v228, %v544
        %v546 = vpop.f32.mrf.mxu0
        %v547 = vadd.f32 %v232, %v546
        %v548 = vpop.f32.mrf.mxu0
        %v549 = vadd.f32 %v228, %v548
        %v550 = vpop.f32.mrf.mxu0
        %v551 = vadd.f32 %v232, %v550
        %552 = vdwg.mxu0
        %553 = vmatprep.subr.bf16.mxu0 0
        %554 = vmatpush1.bf16.msra.mxu0 0
        %555 = vmatprep.subr.bf16.mxu0 0
        %556 = vmatpush1.bf16.msra.mxu0 0
        %557 = vmatprep.subr.bf16.mxu0 0
        %558 = vmatpush1.bf16.msra.mxu0 0
        %559 = vmatprep.subr.bf16.mxu0 0
        %560 = vmatpush1.bf16.msra.mxu0 0
        %561 = vmatprep.subr.bf16.mxu0 0
        %562 = vmatpush1.bf16.msra.mxu0 0
        %563 = vmatprep.subr.bf16.mxu0 0
        %564 = vmatpush1.bf16.msra.mxu0 0
        %565 = vmatprep.subr.bf16.mxu0 %v472
        %566 = vmatpush1.bf16.msra.mxu0 %v469
        %567 = vmatprep.subr.bf16.mxu0 %v409
        %568 = vmatpush1.bf16.msra.mxu0 %v408
        %569 = vmatprep.subr.bf16.mxu0 0
        %570 = vmatpush2.bf16.msra.mxu0 0
        %571 = vmatprep.subr.bf16.mxu0 0
        %572 = vmatpush2.bf16.msra.mxu0 0
        %573 = vmatprep.subr.bf16.mxu0 0
        %574 = vmatpush2.bf16.msra.mxu0 0
        %575 = vmatprep.subr.bf16.mxu0 0
        %576 = vmatpush2.bf16.msra.mxu0 0
        %577 = vmatprep.subr.bf16.mxu0 0
        %578 = vmatpush2.bf16.msra.mxu0 0
        %579 = vmatprep.subr.bf16.mxu0 0
        %580 = vmatpush2.bf16.msra.mxu0 0
        %581 = vmatprep.subr.bf16.mxu0 0
        %582 = vmatpush2.bf16.msra.mxu0 0
        %583 = vmatprep.subr.bf16.mxu0 0
        %584 = vmatpush2.bf16.msra.mxu0 0
        %585 = vmatprep.mubr.bf16.mxu0 0
        %586 = vmatmul.mubr.bf16.gmra.mxu0 %v456
        %v587 = vpop.f32.mrf.mxu0
        %v588 = vadd.f32 %v236, %v587
        %v589 = vpop.f32.mrf.mxu0
        %v590 = vadd.f32 %v240, %v589
        %v591 = vpop.f32.mrf.mxu0
        %v592 = vadd.f32 %v236, %v591
        %v593 = vpop.f32.mrf.mxu0
        %v594 = vadd.f32 %v240, %v593
        %595 = vdwg.mxu0
        %596 = vmatprep.subr.bf16.mxu0 0
        %597 = vmatpush1.bf16.msra.mxu0 0
        %598 = vmatprep.subr.bf16.mxu0 0
        %599 = vmatpush1.bf16.msra.mxu0 0
        %600 = vmatprep.subr.bf16.mxu0 0
        %601 = vmatpush1.bf16.msra.mxu0 0
        %602 = vmatprep.subr.bf16.mxu0 0
        %603 = vmatpush1.bf16.msra.mxu0 0
        %604 = vmatprep.subr.bf16.mxu0 0
        %605 = vmatpush1.bf16.msra.mxu0 0
        %606 = vmatprep.subr.bf16.mxu0 0
        %607 = vmatpush1.bf16.msra.mxu0 0
        %608 = vmatprep.subr.bf16.mxu0 %v478
        %609 = vmatpush1.bf16.msra.mxu0 %v475
        %610 = vmatprep.subr.bf16.mxu0 %v411
        %611 = vmatpush1.bf16.msra.mxu0 %v410
        %612 = vmatprep.subr.bf16.mxu0 0
        %613 = vmatpush2.bf16.msra.mxu0 0
        %614 = vmatprep.subr.bf16.mxu0 0
        %615 = vmatpush2.bf16.msra.mxu0 0
        %616 = vmatprep.subr.bf16.mxu0 0
        %617 = vmatpush2.bf16.msra.mxu0 0
        %618 = vmatprep.subr.bf16.mxu0 0
        %619 = vmatpush2.bf16.msra.mxu0 0
        %620 = vmatprep.subr.bf16.mxu0 0
        %621 = vmatpush2.bf16.msra.mxu0 0
        %622 = vmatprep.subr.bf16.mxu0 0
        %623 = vmatpush2.bf16.msra.mxu0 0
        %624 = vmatprep.subr.bf16.mxu0 0
        %625 = vmatpush2.bf16.msra.mxu0 0
        %626 = vmatprep.subr.bf16.mxu0 0
        %627 = vmatpush2.bf16.msra.mxu0 0
        %628 = vmatprep.mubr.bf16.mxu0 0
        %629 = vmatmul.mubr.bf16.gmra.mxu0 %v456
        %v630 = vpop.f32.mrf.mxu0
        %v631 = vadd.f32 %v244, %v630
        %v632 = vpop.f32.mrf.mxu0
        %v633 = vadd.f32 %v248, %v632
        %v634 = vpop.f32.mrf.mxu0
        %v635 = vadd.f32 %v244, %v634
        %v636 = vpop.f32.mrf.mxu0
        %v637 = vadd.f32 %v248, %v636
        %638 = vdwg.mxu0
        %639 = vmatprep.subr.bf16.mxu0 0
        %640 = vmatpush1.bf16.msra.mxu0 0
        %641 = vmatprep.subr.bf16.mxu0 0
        %642 = vmatpush1.bf16.msra.mxu0 0
        %643 = vmatprep.subr.bf16.mxu0 0
        %644 = vmatpush1.bf16.msra.mxu0 0
        %645 = vmatprep.subr.bf16.mxu0 0
        %646 = vmatpush1.bf16.msra.mxu0 0
        %647 = vmatprep.subr.bf16.mxu0 0
        %648 = vmatpush1.bf16.msra.mxu0 0
        %649 = vmatprep.subr.bf16.mxu0 0
        %650 = vmatpush1.bf16.msra.mxu0 0
        %651 = vmatprep.subr.bf16.mxu0 %v484
        %652 = vmatpush1.bf16.msra.mxu0 %v481
        %653 = vmatprep.subr.bf16.mxu0 %v413
        %654 = vmatpush1.bf16.msra.mxu0 %v412
        %655 = vmatprep.subr.bf16.mxu0 0
        %656 = vmatpush2.bf16.msra.mxu0 0
        %657 = vmatprep.subr.bf16.mxu0 0
        %658 = vmatpush2.bf16.msra.mxu0 0
        %659 = vmatprep.subr.bf16.mxu0 0
        %660 = vmatpush2.bf16.msra.mxu0 0
        %661 = vmatprep.subr.bf16.mxu0 0
        %662 = vmatpush2.bf16.msra.mxu0 0
        %663 = vmatprep.subr.bf16.mxu0 0
        %664 = vmatpush2.bf16.msra.mxu0 0
        %665 = vmatprep.subr.bf16.mxu0 0
        %666 = vmatpush2.bf16.msra.mxu0 0
        %667 = vmatprep.subr.bf16.mxu0 0
        %668 = vmatpush2.bf16.msra.mxu0 0
        %669 = vmatprep.subr.bf16.mxu0 0
        %670 = vmatpush2.bf16.msra.mxu0 0
        %671 = vmatprep.mubr.bf16.mxu0 0
        %672 = vmatmul.mubr.bf16.gmra.mxu0 %v456
        %v673 = vpop.f32.mrf.mxu0
        %v674 = vadd.f32 %v252, %v673
        %v675 = vpop.f32.mrf.mxu0
        %v676 = vadd.f32 %v256, %v675
        %v677 = vpop.f32.mrf.mxu0
        %v678 = vadd.f32 %v252, %v677
        %v679 = vpop.f32.mrf.mxu0
        %v680 = vadd.f32 %v256, %v679
        %681 = vdwg.mxu0
        %682 = vmatprep.subr.bf16.mxu0 0
        %683 = vmatpush1.bf16.msra.mxu0 0
        %684 = vmatprep.subr.bf16.mxu0 0
        %685 = vmatpush1.bf16.msra.mxu0 0
        %686 = vmatprep.subr.bf16.mxu0 0
        %687 = vmatpush1.bf16.msra.mxu0 0
        %688 = vmatprep.subr.bf16.mxu0 0
        %689 = vmatpush1.bf16.msra.mxu0 0
        %690 = vmatprep.subr.bf16.mxu0 0
        %691 = vmatpush1.bf16.msra.mxu0 0
        %692 = vmatprep.subr.bf16.mxu0 0
        %693 = vmatpush1.bf16.msra.mxu0 0
        %694 = vmatprep.subr.bf16.mxu0 %v490
        %695 = vmatpush1.bf16.msra.mxu0 %v487
        %696 = vmatprep.subr.bf16.mxu0 %v415
        %697 = vmatpush1.bf16.msra.mxu0 %v414
        %698 = vmatprep.subr.bf16.mxu0 0
        %699 = vmatpush2.bf16.msra.mxu0 0
        %700 = vmatprep.subr.bf16.mxu0 0
        %701 = vmatpush2.bf16.msra.mxu0 0
        %702 = vmatprep.subr.bf16.mxu0 0
        %703 = vmatpush2.bf16.msra.mxu0 0
        %704 = vmatprep.subr.bf16.mxu0 0
        %705 = vmatpush2.bf16.msra.mxu0 0
        %706 = vmatprep.subr.bf16.mxu0 0
        %707 = vmatpush2.bf16.msra.mxu0 0
        %708 = vmatprep.subr.bf16.mxu0 0
        %709 = vmatpush2.bf16.msra.mxu0 0
        %710 = vmatprep.subr.bf16.mxu0 0
        %711 = vmatpush2.bf16.msra.mxu0 0
        %712 = vmatprep.subr.bf16.mxu0 0
        %713 = vmatpush2.bf16.msra.mxu0 0
        %714 = vmatprep.mubr.bf16.mxu0 0
        %715 = vmatmul.mubr.bf16.gmra.mxu0 %v456
        %v716 = vpop.f32.mrf.mxu0
        %v717 = vadd.f32 %v260, %v716
        %v718 = vpop.f32.mrf.mxu0
        %v719 = vadd.f32 %v264, %v718
        %v720 = vpop.f32.mrf.mxu0
        %v721 = vadd.f32 %v260, %v720
        %v722 = vpop.f32.mrf.mxu0
        %v723 = vadd.f32 %v264, %v722
        %724 = vdwg.mxu0
        %725 = vmatprep.subr.bf16.mxu0 0
        %726 = vmatpush1.bf16.msra.mxu0 0
        %727 = vmatprep.subr.bf16.mxu0 0
        %728 = vmatpush1.bf16.msra.mxu0 0
        %729 = vmatprep.subr.bf16.mxu0 0
        %730 = vmatpush1.bf16.msra.mxu0 0
        %731 = vmatprep.subr.bf16.mxu0 0
        %732 = vmatpush1.bf16.msra.mxu0 0
        %733 = vmatprep.subr.bf16.mxu0 0
        %734 = vmatpush1.bf16.msra.mxu0 0
        %735 = vmatprep.subr.bf16.mxu0 0
        %736 = vmatpush1.bf16.msra.mxu0 0
        %737 = vmatprep.subr.bf16.mxu0 %v496
        %738 = vmatpush1.bf16.msra.mxu0 %v493
        %739 = vmatprep.subr.bf16.mxu0 %v417
        %740 = vmatpush1.bf16.msra.mxu0 %v416
        %741 = vmatprep.subr.bf16.mxu0 0
        %742 = vmatpush2.bf16.msra.mxu0 0
        %743 = vmatprep.subr.bf16.mxu0 0
        %744 = vmatpush2.bf16.msra.mxu0 0
        %745 = vmatprep.subr.bf16.mxu0 0
        %746 = vmatpush2.bf16.msra.mxu0 0
        %747 = vmatprep.subr.bf16.mxu0 0
        %748 = vmatpush2.bf16.msra.mxu0 0
        %749 = vmatprep.subr.bf16.mxu0 0
        %750 = vmatpush2.bf16.msra.mxu0 0
        %751 = vmatprep.subr.bf16.mxu0 0
        %752 = vmatpush2.bf16.msra.mxu0 0
        %753 = vmatprep.subr.bf16.mxu0 0
        %754 = vmatpush2.bf16.msra.mxu0 0
        %755 = vmatprep.subr.bf16.mxu0 0
        %756 = vmatpush2.bf16.msra.mxu0 0
        %757 = vmatprep.mubr.bf16.mxu0 0
        %758 = vmatmul.mubr.bf16.gmra.mxu0 %v456
        %v759 = vpop.f32.mrf.mxu0
        %v760 = vadd.f32 %v268, %v759
        %v761 = vpop.f32.mrf.mxu0
        %v762 = vadd.f32 %v272, %v761
        %v763 = vpop.f32.mrf.mxu0
        %v764 = vadd.f32 %v268, %v763
        %v765 = vpop.f32.mrf.mxu0
        %v766 = vadd.f32 %v272, %v765
        %767 = vdwg.mxu0
        %768 = vmatprep.subr.bf16.mxu0 0
        %769 = vmatpush1.bf16.msra.mxu0 0
        %770 = vmatprep.subr.bf16.mxu0 0
        %771 = vmatpush1.bf16.msra.mxu0 0
        %772 = vmatprep.subr.bf16.mxu0 0
        %773 = vmatpush1.bf16.msra.mxu0 0
        %774 = vmatprep.subr.bf16.mxu0 0
        %775 = vmatpush1.bf16.msra.mxu0 0
        %776 = vmatprep.subr.bf16.mxu0 0
        %777 = vmatpush1.bf16.msra.mxu0 0
        %778 = vmatprep.subr.bf16.mxu0 0
        %779 = vmatpush1.bf16.msra.mxu0 0
        %780 = vmatprep.subr.bf16.mxu0 %v502
        %781 = vmatpush1.bf16.msra.mxu0 %v499
        %782 = vmatprep.subr.bf16.mxu0 %v419
        %783 = vmatpush1.bf16.msra.mxu0 %v418
        %784 = vmatprep.subr.bf16.mxu0 0
        %785 = vmatpush2.bf16.msra.mxu0 0
        %786 = vmatprep.subr.bf16.mxu0 0
        %787 = vmatpush2.bf16.msra.mxu0 0
        %788 = vmatprep.subr.bf16.mxu0 0
        %789 = vmatpush2.bf16.msra.mxu0 0
        %790 = vmatprep.subr.bf16.mxu0 0
        %791 = vmatpush2.bf16.msra.mxu0 0
        %792 = vmatprep.subr.bf16.mxu0 0
        %793 = vmatpush2.bf16.msra.mxu0 0
        %794 = vmatprep.subr.bf16.mxu0 0
        %795 = vmatpush2.bf16.msra.mxu0 0
        %796 = vmatprep.subr.bf16.mxu0 0
        %797 = vmatpush2.bf16.msra.mxu0 0
        %798 = vmatprep.subr.bf16.mxu0 0
        %799 = vmatpush2.bf16.msra.mxu0 0
        %800 = vmatprep.mubr.bf16.mxu0 0
        %801 = vmatmul.mubr.bf16.gmra.mxu0 %v456
        %v802 = vpop.f32.mrf.mxu0
        %v803 = vadd.f32 %v276, %v802
        %v804 = vpop.f32.mrf.mxu0
        %v805 = vadd.f32 %v280, %v804
        %v806 = vpop.f32.mrf.mxu0
        %v807 = vadd.f32 %v276, %v806
        %v808 = vpop.f32.mrf.mxu0
        %v809 = vadd.f32 %v280, %v808
        %810 = vdwg.mxu0
        %811 = vmatprep.subr.bf16.mxu0 0
        %812 = vmatpush1.bf16.msra.mxu0 0
        %813 = vmatprep.subr.bf16.mxu0 0
        %814 = vmatpush1.bf16.msra.mxu0 0
        %815 = vmatprep.subr.bf16.mxu0 0
        %816 = vmatpush1.bf16.msra.mxu0 0
        %817 = vmatprep.subr.bf16.mxu0 0
        %818 = vmatpush1.bf16.msra.mxu0 0
        %819 = vmatprep.subr.bf16.mxu0 0
        %820 = vmatpush1.bf16.msra.mxu0 0
        %821 = vmatprep.subr.bf16.mxu0 0
        %822 = vmatpush1.bf16.msra.mxu0 0
        %823 = vmatprep.subr.bf16.mxu0 %v508
        %824 = vmatpush1.bf16.msra.mxu0 %v505
        %825 = vmatprep.subr.bf16.mxu0 %v421
        %826 = vmatpush1.bf16.msra.mxu0 %v420
        %827 = vmatprep.subr.bf16.mxu0 0
        %828 = vmatpush2.bf16.msra.mxu0 0
        %829 = vmatprep.subr.bf16.mxu0 0
        %830 = vmatpush2.bf16.msra.mxu0 0
        %831 = vmatprep.subr.bf16.mxu0 0
        %832 = vmatpush2.bf16.msra.mxu0 0
        %833 = vmatprep.subr.bf16.mxu0 0
        %834 = vmatpush2.bf16.msra.mxu0 0
        %835 = vmatprep.subr.bf16.mxu0 0
        %836 = vmatpush2.bf16.msra.mxu0 0
        %837 = vmatprep.subr.bf16.mxu0 0
        %838 = vmatpush2.bf16.msra.mxu0 0
        %839 = vmatprep.subr.bf16.mxu0 0
        %840 = vmatpush2.bf16.msra.mxu0 0
        %841 = vmatprep.subr.bf16.mxu0 0
        %842 = vmatpush2.bf16.msra.mxu0 0
        %843 = vmatprep.mubr.bf16.mxu0 0
        %844 = vmatmul.mubr.bf16.gmra.mxu0 %v456
        %v845 = vpop.f32.mrf.mxu0
        %v846 = vadd.f32 %v284, %v845
        %v847 = vpop.f32.mrf.mxu0
        %v848 = vadd.f32 %v288, %v847
        %v849 = vpop.f32.mrf.mxu0
        %v850 = vadd.f32 %v284, %v849
        %v851 = vpop.f32.mrf.mxu0
        %v852 = vadd.f32 %v288, %v851
        %853 = vdwg.mxu0
        %854 = vst [vmem:[%s176] sm:$0xff] %v545
        %855 = vst [vmem:[%s176 + $0x8] sm:$0xff] %v547
        %856 = vst [vmem:[%s176 + $0x10] sm:$0xff] %v588
        %857 = vst [vmem:[%s176 + $0x18] sm:$0xff] %v590
        %858 = vst [vmem:[%s176 + $0x20] sm:$0xff] %v631
        %859 = vst [vmem:[%s176 + $0x28] sm:$0xff] %v633
        %860 = vst [vmem:[%s176 + $0x30] sm:$0xff] %v674
        %861 = vst [vmem:[%s176 + $0x38] sm:$0xff] %v676
        %862 = vst [vmem:[%s176 + $0x40] sm:$0xff] %v717
        %863 = vst [vmem:[%s176 + $0x48] sm:$0xff] %v719
        %864 = vst [vmem:[%s176 + $0x50] sm:$0xff] %v760
        %865 = vst [vmem:[%s176 + $0x58] sm:$0xff] %v762
        %866 = vst [vmem:[%s176 + $0x60] sm:$0xff] %v803
        %867 = vst [vmem:[%s176 + $0x68] sm:$0xff] %v805
        %868 = vst [vmem:[%s176 + $0x70] sm:$0xff] %v846
        %869 = vst [vmem:[%s176 + $0x78] sm:$0xff] %v848
        %870 = vst [vmem:[%s176 + $0x80] sm:$0xff] %v549
        %871 = vst [vmem:[%s176 + $0x88] sm:$0xff] %v551
        %872 = vst [vmem:[%s176 + $0x90] sm:$0xff] %v592
        %873 = vst [vmem:[%s176 + $0x98] sm:$0xff] %v594
        %874 = vst [vmem:[%s176 + $0xa0] sm:$0xff] %v635
        %875 = vst [vmem:[%s176 + $0xa8] sm:$0xff] %v637
        %876 = vst [vmem:[%s176 + $0xb0] sm:$0xff] %v678
        %877 = vst [vmem:[%s176 + $0xb8] sm:$0xff] %v680
        %878 = vst [vmem:[%s176 + $0xc0] sm:$0xff] %v721
        %879 = vst [vmem:[%s176 + $0xc8] sm:$0xff] %v723
        %880 = vst [vmem:[%s176 + $0xd0] sm:$0xff] %v764
        %881 = vst [vmem:[%s176 + $0xd8] sm:$0xff] %v766
        %882 = vst [vmem:[%s176 + $0xe0] sm:$0xff] %v807
        %883 = vst [vmem:[%s176 + $0xe8] sm:$0xff] %v809
        %884 = vst [vmem:[%s176 + $0xf0] sm:$0xff] %v850
        %885 = vst [vmem:[%s176 + $0xf8] sm:$0xff] %v852
        %s886 = sand.u32 %s98, 1
        %s887 = scalar_lea.sflag [#allocation3], %s886
        %s888 = sand.u32 %s98, 1
        %s889 = smul.addr %s888, 256
        %s890 = scalar_lea.vmem [#allocation2], %s889
        // Predicated region
        $region33: #{tpu_custom_call.1} parent=31 // pred_check
          %p891 = pneg %p108
        $region34: #{tpu_custom_call.1} parent=31 // pred_check_branch
          %893 = sbr.rel (%p891) target = $region36
        $region35: #{tpu_custom_call.1} parent=31 // pred_region
          %s895 = ssub.s32 4096, 4096
          %896 = vsyncadd %s887, %s895
          %s897 = smul.addr %s17, 32
          %s898 = smul.addr %s897, 128
          %s899 = scalar_lea.hbm %s3, %s898
          %s900 = sshll.u32 %s890, 4
          %s901 = int_to_ptr.vmem [resolvable:$true] %s900
          %906 = dma.vmem_to_hbm [thread:$0]  %s901, 4096, %s899, %s887, 2048, 2048, 128
        $region36: #{tpu_custom_call.1} parent=31 // pred_fallthru
          _
      $region32: #{tpu_custom_call.1} parent=5 // pred_fallthru
        _
      %p907 = scmp.le.s32.totalorder 2, %s12
      // Predicated region
      $region37: #{tpu_custom_call.1} parent=5 // pred_check
        %p908 = pneg %p907
      $region38: #{tpu_custom_call.1} parent=5 // pred_check_branch
        %910 = sbr.rel (%p908) target = $region40
      $region39: #{tpu_custom_call.1} parent=5 // pred_region
        %s911 = ssub.s32 %s12, 2
        // Predicated region
        $region41: #{tpu_custom_call.1} parent=39 // pred_check
          %p912 = pneg %p114
        $region42: #{tpu_custom_call.1} parent=39 // pred_check_branch
          %914 = sbr.rel (%p912) target = $region44
        $region43: #{tpu_custom_call.1} parent=39 // pred_region
          %s915 = sand.u32 %s99, 1
          %s916 = scalar_lea.sflag [#allocation3], %s915
          %s917 = sand.u32 %s99, 1
          %s918 = smul.addr %s917, 256
          %s919 = scalar_lea.vmem [#allocation2], %s918
          %920 = dma.done %s916, 4096
        $region44: #{tpu_custom_call.1} parent=39 // pred_fallthru
          _
      $region40: #{tpu_custom_call.1} parent=5 // pred_fallthru
        _
    $region6: #{tpu_custom_call.1} parent=1 // loop_footer
      %s16 = sadd.s32 1, %s12
    $region7: #{tpu_custom_call.1} parent=1 // loop_footer_branch
      %11 = sbr.rel target = $region3
    $region8: #{tpu_custom_call.1} parent=1 // loop_exit
      _
    %921 = vsyncpa [#allocation3], 1
    %s922 = scalar_lea.sflag [#allocation3], 1
    %923 = vsyncpa %s922, 1

</llo_original>
